<compile_context>
chip_gen: v5e
topology: v5e:2x2
jax: 0.10.0
libtpu: 0.0.40
codegen_flags: <defaults>
</compile_context>

<pallas_src>
import functools
import math

import jax
import jax.numpy as jnp
from jax.experimental import pallas as pl
from jax.experimental.pallas import tpu as pltpu


# -----------------------------------------------------------------------------
# Kernel 1: two-layer MLP projection + norm / tau folding.
#   out[r] = proj(z[r]) / ||proj(z[r])|| / sqrt(tau)      (emitted as bf16)
# so that  <out_n[i], out_m[j]>  ==  cos_sim(proj_n[i], proj_m[j]) / tau.
# Projection flops are O(N*H^2) << O(N^2*H), so this stage stays f32.
# -----------------------------------------------------------------------------
def _proj_scale_kernel(z_ref, w1_ref, b1_ref, w2_ref, b2_ref, out_ref, *, scale):
    h = jnp.dot(z_ref[...], w1_ref[...],
                preferred_element_type=jnp.float32) + b1_ref[...]
    # ELU (alpha=1); min() keeps exp() off the positive branch.
    h = jnp.where(h > 0, h, jnp.exp(jnp.minimum(h, 0.0)) - 1.0)
    p = jnp.dot(h, w2_ref[...],
                preferred_element_type=jnp.float32) + b2_ref[...]
    norm_sq = jnp.sum(p * p, axis=-1, keepdims=True)
    # rsqrt on the EUP; eps only guards an exactly-zero row (reference would NaN).
    out_ref[...] = (p * (jax.lax.rsqrt(norm_sq + 1e-30) * scale)).astype(out_ref.dtype)


# -----------------------------------------------------------------------------
# Kernel 2: (row-tile x col-tile) similarity, both directions as row stats.
# -----------------------------------------------------------------------------
def _lane_sum128(x):
    # Lane-preserving partial reduction: sum 128-lane chunks with VPU adds,
    # returns (rows, 128).  The final 128-lane XLU reduce happens once, in the
    # epilogue.
    acc = x[:, 0:128]
    for g in range(1, x.shape[1] // 128):
        acc = acc + x[:, g * 128:(g + 1) * 128]
    return acc


def _contrast_kernel(zn_ref, zm_ref, pos_ref, sn_ref, pn_ref, sm_ref, pm_ref,
                     *, tr, tc, n_real, n_pad):
    r = pl.program_id(0)          # row-tile axis ("parallel" -> v7x megacore)
    c = pl.program_id(1)          # column-tile axis ("arbitrary", accumulation)

    @pl.when(c == 0)
    def _init():
        sn_ref[...] = jnp.zeros_like(sn_ref)
        pn_ref[...] = jnp.zeros_like(pn_ref)
        sm_ref[...] = jnp.zeros_like(sm_ref)
        pm_ref[...] = jnp.zeros_like(pm_ref)

    row0 = pl.multiple_of(r * tr, tr)
    col0 = pl.multiple_of(c * tc, tc)
    zn_r = zn_ref[pl.ds(row0, tr), :]      # bf16 row tiles of the resident
    zm_r = zm_ref[pl.ds(row0, tr), :]      # projected / scaled features.
    zn_c = zn_ref[pl.ds(col0, tc), :]
    zm_c = zm_ref[pl.ds(col0, tc), :]

    # Scaling/norms are folded into the rows -> a single bf16 MXU matmul + exp
    # (EUP) per direction; no divides, no norm outer product, no transpose.
    dnum = (((1,), (1,)), ((), ()))
    s_nm = jnp.exp(jax.lax.dot_general(zn_r, zm_c, dnum,
                                       preferred_element_type=jnp.float32))
    s_mn = jnp.exp(jax.lax.dot_general(zm_r, zn_c, dnum,
                                       preferred_element_type=jnp.float32))

    if n_real != n_pad:
        # Exclude padded columns from the row sums (padded rows are excluded
        # in the epilogue).  Only the last column tile actually has padding.
        col_ids = jax.lax.broadcasted_iota(jnp.int32, (1, tc), 1) + c * tc
        colmask = (col_ids < n_real).astype(jnp.float32)
        s_nm = s_nm * colmask
        s_mn = s_mn * colmask

    # The SAME untransposed pos block masks both directions:
    #   n->m:  pos[i, j] masks s_nm[i, j]      (i = row tile, j = col tile)
    #   m->n:  pos[j, i] masks sim_n2m[i, j] == s_mn[j, i]  -> also pos_block.
    pos = pos_ref[...].astype(jnp.float32)

    sn_ref[...] += _lane_sum128(s_nm)
    pn_ref[...] += _lane_sum128(s_nm * pos)
    sm_ref[...] += _lane_sum128(s_mn)
    pm_ref[...] += _lane_sum128(s_mn * pos)


# -----------------------------------------------------------------------------
# Tile / budget helpers.
# -----------------------------------------------------------------------------
def _round_up(x, m):
    return ((x + m - 1) // m) * m


def _pick_row_tile(total_rows):
    for t in (1024, 512, 256, 128):
        if total_rows % t == 0:
            return t
    return total_rows


def _vmem_capacity_bytes():
    try:
        cap = getattr(pltpu.get_tpu_info(), "vmem_capacity_bytes", None)
        if cap:
            return int(cap)
    except Exception:
        pass
    return 64 * 1024 * 1024   # conservative default (v7x per-TensorCore VMEM)


def _pick_tiles(n_pad, hp, vmem_limit, max_tr=None, max_tc=None):
    # Resident projected-row buffers (bf16, assume double-buffered) + slack
    # for Mosaic-internal temporaries.
    resident = 2 * 2 * n_pad * hp * 2
    avail = max(vmem_limit - resident - (4 << 20), 1 << 20)
    cands = [d for d in range(128, min(n_pad, 8192) + 1, 128) if n_pad % d == 0]
    cands_r = [d for d in cands if max_tr is None or d <= max_tr] or [cands[0]]
    cands_c = [d for d in cands if max_tc is None or d <= max_tc] or [cands[0]]
    best = (cands_r[0], cands_c[0])
    for tr in cands_r:
        for tc in cands_c:
            # pos int8 x2 buffers + ~5 live (tr, tc) f32 temps
            # (s_nm, s_mn, masked products, cast mask) + 4 x2 (tr, 128) f32
            # output blocks.
            need = tr * tc * (2 + 20) + 8 * tr * 128 * 4
            if need <= avail and tr * tc > best[0] * best[1]:
                best = (tr, tc)
    return best


# -----------------------------------------------------------------------------
# Wrapper.  w1/w2 are in PyTorch nn.Linear layout (out, in); b1/b2 are (H,).
# -----------------------------------------------------------------------------
def contrast_forward(z_n, z_m, pos, w1, b1, w2, b2, *, tau, lam,
                     max_tile_rows=None, max_tile_cols=None):
    n, h_dim = z_n.shape
    hp = _round_up(max(h_dim, 1), 128)       # lane-dense hidden dim
    n_pad = _round_up(n, 128)                # ragged N handled by padding
    scale = 1.0 / math.sqrt(float(tau))      # folded into BOTH sides

    # --- zero-pad parameters / features (exact for dot products and norms) ---
    def pad_linear(w, b):
        h_out, h_in = w.shape
        wt = jnp.zeros((hp, hp), jnp.float32).at[:h_in, :h_out].set(
            w.T.astype(jnp.float32))
        bp = jnp.zeros((1, hp), jnp.float32).at[0, :h_out].set(
            b.astype(jnp.float32))
        return wt, bp

    w1p, b1p = pad_linear(w1, b1)
    w2p, b2p = pad_linear(w2, b2)

    def pad_rows(z):
        return jnp.zeros((n_pad, hp), jnp.float32).at[:n, :h_dim].set(
            z.astype(jnp.float32))

    tr_p = _pick_row_tile(n_pad)

    def project(z):
        return pl.pallas_call(
            functools.partial(_proj_scale_kernel, scale=scale),
            out_shape=jax.ShapeDtypeStruct((n_pad, hp), jnp.bfloat16),
            grid=(n_pad // tr_p,),
            in_specs=[
                pl.BlockSpec((tr_p, hp), lambda i: (i, 0)),
                pl.BlockSpec((hp, hp), lambda i: (0, 0)),
                pl.BlockSpec((1, hp), lambda i: (0, 0)),
                pl.BlockSpec((hp, hp), lambda i: (0, 0)),
                pl.BlockSpec((1, hp), lambda i: (0, 0)),
            ],
            out_specs=pl.BlockSpec((tr_p, hp), lambda i: (i, 0)),
            compiler_params=pltpu.CompilerParams(
                dimension_semantics=("parallel",)),
        )(pad_rows(z), w1p, b1p, w2p, b2p)

    # No concatenate copy: both views share the (tiny) weights, run twice.
    zn_s = project(z_n)      # (n_pad, hp) bf16 unit-norm / sqrt(tau) rows
    zm_s = project(z_m)

    # 0/1 positive mask, streamed as int8 (exact; quarters mask DMA vs bf16x2).
    # TODO(synk): bit-pack the mask (8 cols / byte) for another 8x reduction.
    pos_i8 = jnp.zeros((n_pad, n_pad), jnp.int8).at[:n, :n].set(
        pos.astype(jnp.int8))

    vmem_limit = int(_vmem_capacity_bytes() * 0.75)   # ~96 MiB v5e/v6e, ~48 MiB v7x
    tr, tc = _pick_tiles(n_pad, hp, vmem_limit, max_tile_rows, max_tile_cols)

    outs = pl.pallas_call(
        functools.partial(_contrast_kernel, tr=tr, tc=tc, n_real=n, n_pad=n_pad),
        out_shape=tuple(jax.ShapeDtypeStruct((n_pad, 128), jnp.float32)
                        for _ in range(4)),
        grid=(n_pad // tr, n_pad // tc),
        in_specs=[
            pl.BlockSpec((n_pad, hp), lambda r, c: (0, 0)),   # zn_s (resident)
            pl.BlockSpec((n_pad, hp), lambda r, c: (0, 0)),   # zm_s (resident)
            pl.BlockSpec((tr, tc), lambda r, c: (r, c)),      # pos int8 tile
        ],
        out_specs=tuple(pl.BlockSpec((tr, 128), lambda r, c: (r, 0))
                        for _ in range(4)),
        compiler_params=pltpu.CompilerParams(
            dimension_semantics=("parallel", "arbitrary"),
            vmem_limit_bytes=vmem_limit),
    )(zn_s, zm_s, pos_i8)
    sn, pn, sm, pm = outs

    # --- tiny O(N) epilogue: final 128-lane reduce + log-space row normalize ---
    row_sum_n = jnp.sum(sn, axis=1)
    row_pos_n = jnp.sum(pn, axis=1)
    row_sum_m = jnp.sum(sm, axis=1)
    row_pos_m = jnp.sum(pm, axis=1)
    #   log(sum(sim * pos) / (rowsum + 1e-8))  ==  reference normalize-then-sum
    log_n = jnp.log(row_pos_n) - jnp.log(row_sum_n + 1e-8)
    log_m = jnp.log(row_pos_m) - jnp.log(row_sum_m + 1e-8)
    if n_pad != n:
        valid = jnp.arange(n_pad) < n
        log_n = jnp.where(valid, log_n, 0.0)
        log_m = jnp.where(valid, log_m, 0.0)
    lori_n = -jnp.sum(log_n) / n
    lori_m = -jnp.sum(log_m) / n
    return lam * lori_n + (1.0 - lam) * lori_m


# -----------------------------------------------------------------------------
# Pure-JAX reference (literal transcription of the PyTorch module).
# -----------------------------------------------------------------------------
def _reference_loss(z_n, z_m, pos, w1, b1, w2, b2, tau, lam):
    hi = jax.lax.Precision.HIGHEST

    def proj(z):
        h = jnp.dot(z, w1.T, precision=hi) + b1
        h = jnp.where(h > 0, h, jnp.exp(jnp.minimum(h, 0.0)) - 1.0)
        return jnp.dot(h, w2.T, precision=hi) + b2

    def sim(a, b):
        an = jnp.sqrt(jnp.sum(a * a, axis=-1, keepdims=True))
        bn = jnp.sqrt(jnp.sum(b * b, axis=-1, keepdims=True))
        num = jnp.dot(a, b.T, precision=hi)
        return jnp.exp(num / (an * bn.T) / tau)

    zp_n, zp_m = proj(z_n), proj(z_m)
    m_n2m = sim(zp_n, zp_m)
    m_m2n = m_n2m.T
    m_n2m = m_n2m / (jnp.sum(m_n2m, axis=1, keepdims=True) + 1e-8)
    lori_n = -jnp.mean(jnp.log(jnp.sum(m_n2m * pos, axis=-1)))
    m_m2n = m_m2n / (jnp.sum(m_m2n, axis=1, keepdims=True) + 1e-8)
    lori_m = -jnp.mean(jnp.log(jnp.sum(m_m2n * pos, axis=-1)))
    return lam * lori_n + (1.0 - lam) * lori_m


def _xavier_normal(key, shape, gain):
    fan_out, fan_in = shape
    std = gain * math.sqrt(2.0 / (fan_in + fan_out))
    return std * jax.random.normal(key, shape, dtype=jnp.float32)


if __name__ == "__main__":
    # N deliberately NOT a multiple of 128 (exercises ragged-N padding + the
    # in-kernel column mask), H=64 (exercises lane padding to 128), and the
    # tile caps force a 3x3 grid (exercises the parallel row axis and the
    # accumulate-over-column-tiles path).
    N, H = 300, 64
    tau, lam = 0.8, 0.5

    key = jax.random.PRNGKey(0)
    k_zn, k_zm, k_pos, k_w1, k_b1, k_w2, k_b2 = jax.random.split(key, 7)

    z_n = jax.random.normal(k_zn, (N, H), dtype=jnp.float32)
    z_m = jax.random.normal(k_zm, (N, H), dtype=jnp.float32)

    # Dense "pos" mask: diagonal always positive (every row has >=1 positive),
    # plus a few random extra positives.
    rand_pos = (jax.random.uniform(k_pos, (N, N)) < 0.1).astype(jnp.float32)
    pos = jnp.clip(rand_pos + jnp.eye(N, dtype=jnp.float32), 0.0, 1.0)

    # nn.Linear(H, H) weights, xavier_normal_(gain=1.414), PyTorch-style biases.
    gain = 1.414
    w1 = _xavier_normal(k_w1, (H, H), gain)
    w2 = _xavier_normal(k_w2, (H, H), gain)
    bound = 1.0 / math.sqrt(H)
    b1 = jax.random.uniform(k_b1, (H,), minval=-bound, maxval=bound,
                            dtype=jnp.float32)
    b2 = jax.random.uniform(k_b2, (H,), minval=-bound, maxval=bound,
                            dtype=jnp.float32)

    loss = contrast_forward(z_n, z_m, pos, w1, b1, w2, b2, tau=tau, lam=lam,
                            max_tile_rows=128, max_tile_cols=128)
    jax.block_until_ready(loss)

    ref = _reference_loss(z_n, z_m, pos, w1, b1, w2, b2, tau, lam)
    jax.block_until_ready(ref)

    assert jnp.isfinite(loss), "loss is not finite"
    assert jnp.allclose(loss, ref, rtol=2e-2, atol=2e-2), (float(loss), float(ref))
    print("KERNEL_OK")
</pallas_src>

<mosaic_0001>
module attributes {stable_mosaic.version = 11 : i64} {
  func.func @_proj_scale_kernel(%arg0: i32, %arg1: memref<128x128xf32, #tpu.memory_space<vmem>>, %arg2: memref<128x128xf32, #tpu.memory_space<vmem>>, %arg3: memref<1x128xf32, #tpu.memory_space<vmem>>, %arg4: memref<128x128xf32, #tpu.memory_space<vmem>>, %arg5: memref<1x128xf32, #tpu.memory_space<vmem>>, %arg6: memref<128x128xbf16, #tpu.memory_space<vmem>>) attributes {dimension_semantics = [#tpu.dimension_semantics<parallel>], iteration_bounds = array<i64: 3>, scalar_prefetch = 0 : i64, scratch_operands = 0 : i64, tpu.core_type = #tpu.core_type<tc>, window_params = [{transform_indices = @transform_0, window_bounds = array<i64: 128, 128>}, {pipeline_mode = #tpu.pipeline_mode<synchronous>, transform_indices = @transform_1, window_bounds = array<i64: 128, 128>}, {pipeline_mode = #tpu.pipeline_mode<synchronous>, transform_indices = @transform_2, window_bounds = array<i64: 1, 128>}, {pipeline_mode = #tpu.pipeline_mode<synchronous>, transform_indices = @transform_3, window_bounds = array<i64: 128, 128>}, {pipeline_mode = #tpu.pipeline_mode<synchronous>, transform_indices = @transform_4, window_bounds = array<i64: 1, 128>}, {transform_indices = @transform_5, window_bounds = array<i64: 128, 128>}]} {
    %c0 = arith.constant 0 : index
    %c0_0 = arith.constant 0 : index
    %0 = vector.load %arg1[%c0, %c0_0] : memref<128x128xf32, #tpu.memory_space<vmem>>, vector<128x128xf32>
    %c0_1 = arith.constant 0 : index
    %c0_2 = arith.constant 0 : index
    %1 = vector.load %arg2[%c0_1, %c0_2] : memref<128x128xf32, #tpu.memory_space<vmem>>, vector<128x128xf32>
    %cst = arith.constant dense<0.000000e+00> : vector<128x128xf32>
    %2 = tpu.matmul %0, %1, %cst {dimension_numbers = #tpu.dot_dimension_numbers<[1], [0], [0], [1], [0, 0, 1, 1], [], []>} : vector<128x128xf32>, vector<128x128xf32>, vector<128x128xf32> -> vector<128x128xf32>
    %c0_3 = arith.constant 0 : index
    %c0_4 = arith.constant 0 : index
    %3 = vector.load %arg3[%c0_3, %c0_4] : memref<1x128xf32, #tpu.memory_space<vmem>>, vector<1x128xf32>
    %4 = vector.broadcast %3 : vector<1x128xf32> to vector<128x128xf32>
    %5 = arith.addf %2, %4 : vector<128x128xf32>
    %cst_5 = arith.constant 0.000000e+00 : f32
    %6 = vector.broadcast %cst_5 : f32 to vector<128x128xf32>
    %7 = arith.cmpf ogt, %5, %6 : vector<128x128xf32>
    %cst_6 = arith.constant 0.000000e+00 : f32
    %8 = vector.broadcast %cst_6 : f32 to vector<128x128xf32>
    %9 = arith.minimumf %5, %8 : vector<128x128xf32>
    %10 = math.exp %9 : vector<128x128xf32>
    %cst_7 = arith.constant 1.000000e+00 : f32
    %11 = vector.broadcast %cst_7 : f32 to vector<128x128xf32>
    %12 = arith.subf %10, %11 : vector<128x128xf32>
    %13 = arith.select %7, %5, %12 : vector<128x128xi1>, vector<128x128xf32>
    %c0_8 = arith.constant 0 : index
    %c0_9 = arith.constant 0 : index
    %14 = vector.load %arg4[%c0_8, %c0_9] : memref<128x128xf32, #tpu.memory_space<vmem>>, vector<128x128xf32>
    %cst_10 = arith.constant dense<0.000000e+00> : vector<128x128xf32>
    %15 = tpu.matmul %13, %14, %cst_10 {dimension_numbers = #tpu.dot_dimension_numbers<[1], [0], [0], [1], [0, 0, 1, 1], [], []>} : vector<128x128xf32>, vector<128x128xf32>, vector<128x128xf32> -> vector<128x128xf32>
    %c0_11 = arith.constant 0 : index
    %c0_12 = arith.constant 0 : index
    %16 = vector.load %arg5[%c0_11, %c0_12] : memref<1x128xf32, #tpu.memory_space<vmem>>, vector<1x128xf32>
    %17 = vector.broadcast %16 : vector<1x128xf32> to vector<128x128xf32>
    %18 = arith.addf %15, %17 : vector<128x128xf32>
    %19 = arith.mulf %18, %18 : vector<128x128xf32>
    %cst_13 = arith.constant dense<0.000000e+00> : vector<128xf32>
    %20 = vector.multi_reduction <add>, %19, %cst_13 [1] : vector<128x128xf32> to vector<128xf32>
    %21 = vector.shape_cast %20 : vector<128xf32> to vector<128x1xf32>
    %cst_14 = arith.constant 1.000000e-30 : f32
    %22 = vector.broadcast %cst_14 : f32 to vector<128x1xf32>
    %23 = arith.addf %21, %22 : vector<128x1xf32>
    %24 = math.rsqrt %23 : vector<128x1xf32>
    %cst_15 = arith.constant 1.11803401 : f32
    %25 = vector.broadcast %cst_15 : f32 to vector<128x1xf32>
    %26 = arith.mulf %24, %25 : vector<128x1xf32>
    %27 = vector.broadcast %26 : vector<128x1xf32> to vector<128x128xf32>
    %28 = arith.mulf %18, %27 : vector<128x128xf32>
    %29 = arith.truncf %28 : vector<128x128xf32> to vector<128x128xbf16>
    %c0_16 = arith.constant 0 : index
    %c0_17 = arith.constant 0 : index
    %30 = vector.load %arg6[%c0_16, %c0_17] : memref<128x128xbf16, #tpu.memory_space<vmem>>, vector<128x128xbf16>
    tpu.vector_store %arg6[%c0_16, %c0_17], %29 {strides = array<i32>} : memref<128x128xbf16, #tpu.memory_space<vmem>>, vector<128x128xbf16>,
    return
  }
  func.func @transform_0(%arg0: i32) -> (i32, i32) {
    %c0_i32 = arith.constant 0 : i32
    %c0_i32_0 = arith.constant 0 : i32
    return %arg0, %c0_i32 : i32, i32
  }
  func.func @transform_1(%arg0: i32) -> (i32, i32) {
    %c0_i32 = arith.constant 0 : i32
    %c0_i32_0 = arith.constant 0 : i32
    %c0_i32_1 = arith.constant 0 : i32
    return %c0_i32, %c0_i32_0 : i32, i32
  }
  func.func @transform_2(%arg0: i32) -> (i32, i32) {
    %c0_i32 = arith.constant 0 : i32
    %c0_i32_0 = arith.constant 0 : i32
    %c0_i32_1 = arith.constant 0 : i32
    return %c0_i32, %c0_i32_0 : i32, i32
  }
  func.func @transform_3(%arg0: i32) -> (i32, i32) {
    %c0_i32 = arith.constant 0 : i32
    %c0_i32_0 = arith.constant 0 : i32
    %c0_i32_1 = arith.constant 0 : i32
    return %c0_i32, %c0_i32_0 : i32, i32
  }
  func.func @transform_4(%arg0: i32) -> (i32, i32) {
    %c0_i32 = arith.constant 0 : i32
    %c0_i32_0 = arith.constant 0 : i32
    %c0_i32_1 = arith.constant 0 : i32
    return %c0_i32, %c0_i32_0 : i32, i32
  }
  func.func @transform_5(%arg0: i32) -> (i32, i32) {
    %c0_i32 = arith.constant 0 : i32
    %c0_i32_0 = arith.constant 0 : i32
    return %arg0, %c0_i32 : i32, i32
  }
}

</mosaic_0001>

<llo_original>
// kernel: tpu_custom_call.1
$region0: #{tpu_custom_call.1}
  #allocation0 [shape = 'u32[]', space=smem, size = 0x4, offset = 0x4, fixed_abs, tag = 'smem constant byte address 0x4 - core index']
  #allocation1 [shape = 'u32[72,128]{1,0:T(1,128)}', space=vmem, size = 0x9000, scoped, tag = 'internal scratch']
  %s0 = inlined_call_operand.hbm [shape: f32[384,128], index: 0, kind: input, shape index: {}]
  %s1 = inlined_call_operand.hbm [shape: f32[128,128], index: 1, kind: input, shape index: {}]
  %s2 = inlined_call_operand.vmem [shape: f32[1,128], index: 2, kind: input, shape index: {}]
  %s3 = inlined_call_operand.hbm [shape: f32[128,128], index: 3, kind: input, shape index: {}]
  %s4 = inlined_call_operand.vmem [shape: f32[1,128], index: 4, kind: input, shape index: {}]
  %s5 = inlined_call_operand.hbm [shape: bf16[384,128], index: 5, kind: output, shape index: {}]
  %s6 = sld [smem:[#allocation0]]
  $region65: #{tpu_custom_call.1} parent=0
    _
  %s8 = ssub.s32 1, %s6
  %s9 = scalar_select 0, %s8, %s6
  $region1: #{tpu_custom_call.1} parent=0
    #allocation2 [shape = 'u8[131072]{0}', space=vmem, size = 0x20000, scoped, tag = 'input window, operand 0']
    #allocation3 [shape = 's32[2]{0}', space=sflag, size = 0x8, scoped, tag = 'scoped memory for tpu_custom_call.1']
    #allocation4 [shape = 's32[2]{0}', space=sflag, size = 0x8, scoped, tag = 'scoped memory for tpu_custom_call.1']
    #allocation5 [shape = 'u8[65536]{0}', space=vmem, size = 0x10000, scoped, tag = 'input window, operand 1, single buffered']
    #allocation6 [shape = 's32[1]{0}', space=sflag, size = 0x4, scoped, tag = 'scoped memory for tpu_custom_call.1']
    #allocation7 [shape = 'u8[65536]{0}', space=vmem, size = 0x10000, scoped, tag = 'input window, operand 3, single buffered']
    #allocation8 [shape = 'u8[65536]{0}', space=vmem, size = 0x10000, scoped, tag = 'output window, operand 0']
    %10 = vsyncpa [#allocation3], 0
    %s11 = scalar_lea.sflag [#allocation3], 1
    %12 = vsyncpa %s11, 0
    %13 = vsyncpa [#allocation6], 0
    %14 = vsyncpa [#allocation4], 0
    %s15 = scalar_lea.sflag [#allocation4], 1
    %16 = vsyncpa %s15, 0
    loop: start=0, step=1, limit=5
    $region2: #{tpu_custom_call.1} parent=1 // loop_pre_header
      _
    $region3: #{tpu_custom_call.1} parent=1 // loop_header
      %s18 = sphi 0, %s22
      %p19 = scmp.ge.s32.totalorder %s18, 5
      %s28 = sphi 0, %s30
      %s31 = sphi 0, %s28
      %s32 = sphi 0, %s31
      %s48 = sphi 0, %s32
      %s52 = sphi 0, %s52
      %s54 = sphi 0, %s52
      %s55 = sphi 0, %s54
      %s69 = sphi 0, %s55
      %s73 = sphi 0, %s73
      %s75 = sphi 0, %s73
      %s76 = sphi 0, %s75
      %s90 = sphi 0, %s76
      %s94 = sphi 0, %s94
      %s96 = sphi 0, %s94
      %s97 = sphi 0, %s96
      %s111 = sphi 0, %s97
      %s115 = sphi 0, %s115
      %s117 = sphi 0, %s115
      %s118 = sphi 0, %s117
      %s132 = sphi 0, %s118
      %s138 = sphi 0, %s140
      %s141 = sphi 0, %s138
      %s142 = sphi 0, %s141
      %s158 = sphi 0, %s142
    $region4: #{tpu_custom_call.1} parent=1 // loop_header_branch
      %21 = sbr.rel (%p19) target = $region8
    $region5: #{tpu_custom_call.1} parent=1 // loop_body
      %s23 = ssub.s32 %s18, 1
      %s24 = ssub.s32 %s18, 2
      %s25 = sadd.s32 %s18, 1
      %s26 = ssub.s32 %s18, %s25
      %p27 = scmp.eq.s32.totalorder %s26, 0
      %s29 = sadd.s32 %s28, 1
      %s30 = scalar_select %p27, %s28, %s29
      %p33 = pneg %p27
      %p34 = scmp.eq.s32.totalorder %s18, 2
      %p35 = por %p33, %p34
      %p36 = scmp.ne.s32.totalorder %s28, %s31
      %p37 = scmp.eq.s32.totalorder %s18, 0
      %p38 = por %p36, %p37
      %p39 = scmp.ne.s32.totalorder %s28, %s31
      %p40 = scmp.eq.s32.totalorder %s23, 2
      %p41 = por %p39, %p40
      %p42 = scmp.ne.s32.totalorder %s31, %s32
      %p43 = scmp.eq.s32.totalorder %s23, 0
      %p44 = por %p42, %p43
      %p45 = scmp.ne.s32.totalorder %s31, %s32
      %p46 = scmp.eq.s32.totalorder %s24, 2
      %p47 = por %p45, %p46
      %p49 = scmp.ne.s32.totalorder %s32, %s48
      %p50 = scmp.eq.s32.totalorder %s24, 0
      %p51 = por %p49, %p50
      %s53 = sadd.s32 %s52, 1
      %p56 = scmp.eq.s32.totalorder %s18, 2
      %p57 = scmp.ne.s32.totalorder %s52, %s54
      %p58 = scmp.eq.s32.totalorder %s18, 0
      %p59 = por %p57, %p58
      %p60 = scmp.ne.s32.totalorder %s52, %s54
      %p61 = scmp.eq.s32.totalorder %s23, 2
      %p62 = por %p60, %p61
      %p63 = scmp.ne.s32.totalorder %s54, %s55
      %p64 = scmp.eq.s32.totalorder %s23, 0
      %p65 = por %p63, %p64
      %p66 = scmp.ne.s32.totalorder %s54, %s55
      %p67 = scmp.eq.s32.totalorder %s24, 2
      %p68 = por %p66, %p67
      %p70 = scmp.ne.s32.totalorder %s55, %s69
      %p71 = scmp.eq.s32.totalorder %s24, 0
      %p72 = por %p70, %p71
      %s74 = sadd.s32 %s73, 1
      %p77 = scmp.eq.s32.totalorder %s18, 2
      %p78 = scmp.ne.s32.totalorder %s73, %s75
      %p79 = scmp.eq.s32.totalorder %s18, 0
      %p80 = por %p78, %p79
      %p81 = scmp.ne.s32.totalorder %s73, %s75
      %p82 = scmp.eq.s32.totalorder %s23, 2
      %p83 = por %p81, %p82
      %p84 = scmp.ne.s32.totalorder %s75, %s76
      %p85 = scmp.eq.s32.totalorder %s23, 0
      %p86 = por %p84, %p85
      %p87 = scmp.ne.s32.totalorder %s75, %s76
      %p88 = scmp.eq.s32.totalorder %s24, 2
      %p89 = por %p87, %p88
      %p91 = scmp.ne.s32.totalorder %s76, %s90
      %p92 = scmp.eq.s32.totalorder %s24, 0
      %p93 = por %p91, %p92
      %s95 = sadd.s32 %s94, 1
      %p98 = scmp.eq.s32.totalorder %s18, 2
      %p99 = scmp.ne.s32.totalorder %s94, %s96
      %p100 = scmp.eq.s32.totalorder %s18, 0
      %p101 = por %p99, %p100
      %p102 = scmp.ne.s32.totalorder %s94, %s96
      %p103 = scmp.eq.s32.totalorder %s23, 2
      %p104 = por %p102, %p103
      %p105 = scmp.ne.s32.totalorder %s96, %s97
      %p106 = scmp.eq.s32.totalorder %s23, 0
      %p107 = por %p105, %p106
      %p108 = scmp.ne.s32.totalorder %s96, %s97
      %p109 = scmp.eq.s32.totalorder %s24, 2
      %p110 = por %p108, %p109
      %p112 = scmp.ne.s32.totalorder %s97, %s111
      %p113 = scmp.eq.s32.totalorder %s24, 0
      %p114 = por %p112, %p113
      %s116 = sadd.s32 %s115, 1
      %p119 = scmp.eq.s32.totalorder %s18, 2
      %p120 = scmp.ne.s32.totalorder %s115, %s117
      %p121 = scmp.eq.s32.totalorder %s18, 0
      %p122 = por %p120, %p121
      %p123 = scmp.ne.s32.totalorder %s115, %s117
      %p124 = scmp.eq.s32.totalorder %s23, 2
      %p125 = por %p123, %p124
      %p126 = scmp.ne.s32.totalorder %s117, %s118
      %p127 = scmp.eq.s32.totalorder %s23, 0
      %p128 = por %p126, %p127
      %p129 = scmp.ne.s32.totalorder %s117, %s118
      %p130 = scmp.eq.s32.totalorder %s24, 2
      %p131 = por %p129, %p130
      %p133 = scmp.ne.s32.totalorder %s118, %s132
      %p134 = scmp.eq.s32.totalorder %s24, 0
      %p135 = por %p133, %p134
      %s136 = ssub.s32 %s18, %s25
      %p137 = scmp.eq.s32.totalorder %s136, 0
      %s139 = sadd.s32 %s138, 1
      %s140 = scalar_select %p137, %s138, %s139
      %p143 = pneg %p137
      %p144 = scmp.eq.s32.totalorder %s18, 2
      %p145 = por %p143, %p144
      %p146 = scmp.ne.s32.totalorder %s138, %s141
      %p147 = scmp.eq.s32.totalorder %s18, 0
      %p148 = por %p146, %p147
      %p149 = scmp.ne.s32.totalorder %s138, %s141
      %p150 = scmp.eq.s32.totalorder %s23, 2
      %p151 = por %p149, %p150
      %p152 = scmp.ne.s32.totalorder %s141, %s142
      %p153 = scmp.eq.s32.totalorder %s23, 0
      %p154 = por %p152, %p153
      %p155 = scmp.ne.s32.totalorder %s141, %s142
      %p156 = scmp.eq.s32.totalorder %s24, 2
      %p157 = por %p155, %p156
      %p159 = scmp.ne.s32.totalorder %s142, %s158
      %p160 = scmp.eq.s32.totalorder %s24, 0
      %p161 = por %p159, %p160
      %p162 = scmp.le.s32.totalorder 1, %s18
      %p163 = scmp.lt.s32.totalorder %s18, 4
      %p164 = pnand %p162, %p163
      %p165 = pneg %p164
      // Predicated region
      $region9: #{tpu_custom_call.1} parent=5 // pred_check
        _
      $region10: #{tpu_custom_call.1} parent=5 // pred_check_branch
        %167 = sbr.rel (%p164) target = $region12
      $region11: #{tpu_custom_call.1} parent=5 // pred_region
        %s168 = ssub.s32 %s18, 1
        // Predicated region
        $region13: #{tpu_custom_call.1} parent=11 // pred_check
          %p169 = pneg %p65
        $region14: #{tpu_custom_call.1} parent=11 // pred_check_branch
          %171 = sbr.rel (%p169) target = $region16
        $region15: #{tpu_custom_call.1} parent=11 // pred_region
          %173 = vsyncadd [#allocation6], 0
          %s174 = sshll.u32 %s1, 4
          %s175 = int_to_ptr.hbm [resolvable:$true] %s174
          %s176 = sshll.u32 [#allocation5], 4
          %s177 = int_to_ptr.vmem [resolvable:$true] %s176
          %182 = dma.hbm_to_vmem [thread:$0]  %s175, 2048, %s177, [#allocation6], 128, 128, 8
        $region16: #{tpu_custom_call.1} parent=11 // pred_fallthru
          _
        // Predicated region
        $region17: #{tpu_custom_call.1} parent=11 // pred_check
          %p183 = pneg %p86
        $region18: #{tpu_custom_call.1} parent=11 // pred_check_branch
          %185 = sbr.rel (%p183) target = $region20
        $region19: #{tpu_custom_call.1} parent=11 // pred_region
          _
        $region20: #{tpu_custom_call.1} parent=11 // pred_fallthru
          _
        // Predicated region
        $region21: #{tpu_custom_call.1} parent=11 // pred_check
          %p186 = pneg %p107
        $region22: #{tpu_custom_call.1} parent=11 // pred_check_branch
          %188 = sbr.rel (%p186) target = $region24
        $region23: #{tpu_custom_call.1} parent=11 // pred_region
          %190 = vsyncadd [#allocation6], 0
          %s191 = sshll.u32 %s3, 4
          %s192 = int_to_ptr.hbm [resolvable:$true] %s191
          %s193 = sshll.u32 [#allocation7], 4
          %s194 = int_to_ptr.vmem [resolvable:$true] %s193
          %199 = dma.hbm_to_vmem [thread:$0]  %s192, 2048, %s194, [#allocation6], 128, 128, 8
        $region24: #{tpu_custom_call.1} parent=11 // pred_fallthru
          _
        // Predicated region
        $region25: #{tpu_custom_call.1} parent=11 // pred_check
          %p200 = pneg %p128
        $region26: #{tpu_custom_call.1} parent=11 // pred_check_branch
          %202 = sbr.rel (%p200) target = $region28
        $region27: #{tpu_custom_call.1} parent=11 // pred_region
          _
        $region28: #{tpu_custom_call.1} parent=11 // pred_fallthru
          _
      $region12: #{tpu_custom_call.1} parent=5 // pred_fallthru
        _
      %p203 = scmp.lt.s32.totalorder %s18, 3
      // Predicated region
      $region29: #{tpu_custom_call.1} parent=5 // pred_check
        %p204 = pneg %p203
      $region30: #{tpu_custom_call.1} parent=5 // pred_check_branch
        %206 = sbr.rel (%p204) target = $region32
      $region31: #{tpu_custom_call.1} parent=5 // pred_region
        // Predicated region
        $region33: #{tpu_custom_call.1} parent=31 // pred_check
          %p207 = pneg %p38
        $region34: #{tpu_custom_call.1} parent=31 // pred_check_branch
          %209 = sbr.rel (%p207) target = $region36
        $region35: #{tpu_custom_call.1} parent=31 // pred_region
          %s210 = sand.u32 %s28, 1
          %s211 = scalar_lea.sflag [#allocation3], %s210
          %s212 = sand.u32 %s28, 1
          %s213 = smul.addr %s212, 128
          %s214 = scalar_lea.vmem [#allocation2], %s213
          %s215 = smul.u32 16, %s18
          %217 = vsyncadd %s211, 0
          %s218 = smul.addr %s215, 8
          %s219 = scalar_lea.hbm %s0, %s218
          %s220 = sshll.u32 %s219, 4
          %s221 = int_to_ptr.hbm [resolvable:$true] %s220
          %s222 = sshll.u32 %s214, 4
          %s223 = int_to_ptr.vmem [resolvable:$true] %s222
          %228 = dma.hbm_to_vmem [thread:$0]  %s221, 2048, %s223, %s211, 128, 128, 8
        $region36: #{tpu_custom_call.1} parent=31 // pred_fallthru
          _
      $region32: #{tpu_custom_call.1} parent=5 // pred_fallthru
        _
      %p229 = scmp.le.s32.totalorder 1, %s18
      %p230 = scmp.lt.s32.totalorder %s18, 4
      %p231 = pnand %p229, %p230
      %p232 = pneg %p231
      // Predicated region
      $region37: #{tpu_custom_call.1} parent=5 // pred_check
        _
      $region38: #{tpu_custom_call.1} parent=5 // pred_check_branch
        %234 = sbr.rel (%p231) target = $region40
      $region39: #{tpu_custom_call.1} parent=5 // pred_region
        %s235 = ssub.s32 %s18, 1
        %s236 = sand.u32 %s31, 1
        %s237 = scalar_lea.sflag [#allocation3], %s236
        %s238 = sand.u32 %s31, 1
        %s239 = smul.addr %s238, 128
        %s240 = scalar_lea.vmem [#allocation2], %s239
        // Predicated region
        $region41: #{tpu_custom_call.1} parent=39 // pred_check
          %p241 = pneg %p44
        $region42: #{tpu_custom_call.1} parent=39 // pred_check_branch
          %243 = sbr.rel (%p241) target = $region44
        $region43: #{tpu_custom_call.1} parent=39 // pred_region
          %245 = dma.done %s237, 2048
        $region44: #{tpu_custom_call.1} parent=39 // pred_fallthru
          _
        // Predicated region
        $region45: #{tpu_custom_call.1} parent=39 // pred_check
          %p246 = pneg %p65
        $region46: #{tpu_custom_call.1} parent=39 // pred_check_branch
          %248 = sbr.rel (%p246) target = $region48
        $region47: #{tpu_custom_call.1} parent=39 // pred_region
          %250 = dma.done [#allocation6], 2048
        $region48: #{tpu_custom_call.1} parent=39 // pred_fallthru
          _
        // Predicated region
        $region49: #{tpu_custom_call.1} parent=39 // pred_check
          %p251 = pneg %p107
        $region50: #{tpu_custom_call.1} parent=39 // pred_check_branch
          %253 = sbr.rel (%p251) target = $region52
        $region51: #{tpu_custom_call.1} parent=39 // pred_region
          %255 = dma.done [#allocation6], 2048
        $region52: #{tpu_custom_call.1} parent=39 // pred_fallthru
          _
        %s256 = sand.u32 %s31, 1
        %s257 = scalar_lea.sflag [#allocation3], %s256
        %s258 = sand.u32 %s31, 1
        %s259 = smul.addr %s258, 128
        %s260 = scalar_lea.vmem [#allocation2], %s259
        %p261 = pneg %p44
        %p262 = pneg %p41
        %p263 = pneg %p65
        %p264 = pneg %p62
        %p265 = pneg %p86
        %p266 = pneg %p83
        %p267 = pneg %p107
        %p268 = pneg %p104
        %p269 = pneg %p128
        %p270 = pneg %p125
        %p271 = pneg %p154
        %p272 = pneg %p151
        %s273 = sand.u32 %s141, 1
        %s274 = scalar_lea.sflag [#allocation4], %s273
        %s275 = sand.u32 %s141, 1
        %s276 = smul.addr %s275, 64
        %s277 = scalar_lea.vmem [#allocation8], %s276
        %s278 = smul.u32 16, %s23
        %s279 = smul.u32 16, %s23
        %v280 = vld [vmem:[%s240] sm:$0xff]
        %v281 = vld [vmem:[%s240 + $0x8] sm:$0xff]
        %v282 = vld [vmem:[%s240 + $0x10] sm:$0xff]
        %v283 = vld [vmem:[%s240 + $0x18] sm:$0xff]
        %v284 = vld [vmem:[%s240 + $0x20] sm:$0xff]
        %v285 = vld [vmem:[%s240 + $0x28] sm:$0xff]
        %v286 = vld [vmem:[%s240 + $0x30] sm:$0xff]
        %v287 = vld [vmem:[%s240 + $0x38] sm:$0xff]
        %v288 = vld [vmem:[%s240 + $0x40] sm:$0xff]
        %v289 = vld [vmem:[%s240 + $0x48] sm:$0xff]
        %v290 = vld [vmem:[%s240 + $0x50] sm:$0xff]
        %v291 = vld [vmem:[%s240 + $0x58] sm:$0xff]
        %v292 = vld [vmem:[%s240 + $0x60] sm:$0xff]
        %v293 = vld [vmem:[%s240 + $0x68] sm:$0xff]
        %v294 = vld [vmem:[%s240 + $0x70] sm:$0xff]
        %v295 = vld [vmem:[%s240 + $0x78] sm:$0xff]
        %v296 = vld [vmem:[#allocation5] sm:$0xff]
        %v297 = vld [vmem:[#allocation5 + $0x8] sm:$0xff]
        %v298 = vld [vmem:[#allocation5 + $0x10] sm:$0xff]
        %v299 = vld [vmem:[#allocation5 + $0x18] sm:$0xff]
        %v300 = vld [vmem:[#allocation5 + $0x20] sm:$0xff]
        %v301 = vld [vmem:[#allocation5 + $0x28] sm:$0xff]
        %v302 = vld [vmem:[#allocation5 + $0x30] sm:$0xff]
        %v303 = vld [vmem:[#allocation5 + $0x38] sm:$0xff]
        %v304 = vld [vmem:[#allocation5 + $0x40] sm:$0xff]
        %v305 = vld [vmem:[#allocation5 + $0x48] sm:$0xff]
        %v306 = vld [vmem:[#allocation5 + $0x50] sm:$0xff]
        %v307 = vld [vmem:[#allocation5 + $0x58] sm:$0xff]
        %v308 = vld [vmem:[#allocation5 + $0x60] sm:$0xff]
        %v309 = vld [vmem:[#allocation5 + $0x68] sm:$0xff]
        %v310 = vld [vmem:[#allocation5 + $0x70] sm:$0xff]
        %v311 = vld [vmem:[#allocation5 + $0x78] sm:$0xff]
        %v312 = vld [vmem:[%s2] sm:$0x1]
        %v314 = vperm.slane %v312, 0
        %316 = vmatpush.msra.mxu0 %v311
        %317 = vmatpush.msra.mxu0 %v310
        %318 = vmatpush.msra.mxu0 %v309
        %319 = vmatpush.msra.mxu0 %v308
        %320 = vmatpush.msra.mxu0 %v307
        %321 = vmatpush.msra.mxu0 %v306
        %322 = vmatpush.msra.mxu0 %v305
        %323 = vmatpush.msra.mxu0 %v304
        %324 = vmatpush.msra.mxu0 %v303
        %325 = vmatpush.msra.mxu0 %v302
        %326 = vmatpush.msra.mxu0 %v301
        %327 = vmatpush.msra.mxu0 %v300
        %328 = vmatpush.msra.mxu0 %v299
        %329 = vmatpush.msra.mxu0 %v298
        %330 = vmatpush.msra.mxu0 %v297
        %331 = vmatpush.msra.mxu0 %v296
        %332 = vmatmul.f32.gmra.mxu0 %v280
        %v333 = vpop.f32.mrf.mxu0
        %v334 = vadd.f32 %v314, %v333
        %335 = vmatmul.f32.gmra.mxu0 %v281
        %v336 = vpop.f32.mrf.mxu0
        %v337 = vadd.f32 %v314, %v336
        %338 = vmatmul.f32.gmra.mxu0 %v282
        %v339 = vpop.f32.mrf.mxu0
        %v340 = vadd.f32 %v314, %v339
        %341 = vmatmul.f32.gmra.mxu0 %v283
        %v342 = vpop.f32.mrf.mxu0
        %v343 = vadd.f32 %v314, %v342
        %344 = vmatmul.f32.gmra.mxu0 %v284
        %v345 = vpop.f32.mrf.mxu0
        %v346 = vadd.f32 %v314, %v345
        %347 = vmatmul.f32.gmra.mxu0 %v285
        %v348 = vpop.f32.mrf.mxu0
        %v349 = vadd.f32 %v314, %v348
        %350 = vmatmul.f32.gmra.mxu0 %v286
        %v351 = vpop.f32.mrf.mxu0
        %v352 = vadd.f32 %v314, %v351
        %353 = vmatmul.f32.gmra.mxu0 %v287
        %v354 = vpop.f32.mrf.mxu0
        %v355 = vadd.f32 %v314, %v354
        %356 = vmatmul.f32.gmra.mxu0 %v288
        %v357 = vpop.f32.mrf.mxu0
        %v358 = vadd.f32 %v314, %v357
        %359 = vmatmul.f32.gmra.mxu0 %v289
        %v360 = vpop.f32.mrf.mxu0
        %v361 = vadd.f32 %v314, %v360
        %362 = vmatmul.f32.gmra.mxu0 %v290
        %v363 = vpop.f32.mrf.mxu0
        %v364 = vadd.f32 %v314, %v363
        %365 = vmatmul.f32.gmra.mxu0 %v291
        %v366 = vpop.f32.mrf.mxu0
        %v367 = vadd.f32 %v314, %v366
        %368 = vmatmul.f32.gmra.mxu0 %v292
        %v369 = vpop.f32.mrf.mxu0
        %v370 = vadd.f32 %v314, %v369
        %371 = vmatmul.f32.gmra.mxu0 %v293
        %v372 = vpop.f32.mrf.mxu0
        %v373 = vadd.f32 %v314, %v372
        %374 = vmatmul.f32.gmra.mxu0 %v294
        %v375 = vpop.f32.mrf.mxu0
        %v376 = vadd.f32 %v314, %v375
        %377 = vmatmul.f32.gmra.mxu0 %v295
        %v378 = vpop.f32.mrf.mxu0
        %v379 = vadd.f32 %v314, %v378
        %380 = vdwg.mxu0
        %vm381 = vcmp.gt.f32.partialorder %v334, 0.0
        %vm382 = vcmp.gt.f32.partialorder %v337, 0.0
        %vm383 = vcmp.gt.f32.partialorder %v340, 0.0
        %vm384 = vcmp.gt.f32.partialorder %v343, 0.0
        %vm385 = vcmp.gt.f32.partialorder %v346, 0.0
        %vm386 = vcmp.gt.f32.partialorder %v349, 0.0
        %vm387 = vcmp.gt.f32.partialorder %v352, 0.0
        %vm388 = vcmp.gt.f32.partialorder %v355, 0.0
        %vm389 = vcmp.gt.f32.partialorder %v358, 0.0
        %vm390 = vcmp.gt.f32.partialorder %v361, 0.0
        %vm391 = vcmp.gt.f32.partialorder %v364, 0.0
        %vm392 = vcmp.gt.f32.partialorder %v367, 0.0
        %vm393 = vcmp.gt.f32.partialorder %v370, 0.0
        %vm394 = vcmp.gt.f32.partialorder %v373, 0.0
        %vm395 = vcmp.gt.f32.partialorder %v376, 0.0
        %vm396 = vcmp.gt.f32.partialorder %v379, 0.0
        %v397 = vmin.f32 %v334, 0.0
        %v398 = vmin.f32 %v337, 0.0
        %v399 = vmin.f32 %v340, 0.0
        %v400 = vmin.f32 %v343, 0.0
        %v401 = vmin.f32 %v346, 0.0
        %v402 = vmin.f32 %v349, 0.0
        %v403 = vmin.f32 %v352, 0.0
        %v404 = vmin.f32 %v355, 0.0
        %v405 = vmin.f32 %v358, 0.0
        %v406 = vmin.f32 %v361, 0.0
        %v407 = vmin.f32 %v364, 0.0
        %v408 = vmin.f32 %v367, 0.0
        %v409 = vmin.f32 %v370, 0.0
        %v410 = vmin.f32 %v373, 0.0
        %v411 = vmin.f32 %v376, 0.0
        %v412 = vmin.f32 %v379, 0.0
        %v413 = vmul.f32 %v397, 1.442695
        %v414 = vpow.pop %v413
        %v415 = vmul.f32 %v398, 1.442695
        %v416 = vpow.pop %v415
        %v417 = vmul.f32 %v399, 1.442695
        %v418 = vpow.pop %v417
        %v419 = vmul.f32 %v400, 1.442695
        %v420 = vpow.pop %v419
        %v421 = vmul.f32 %v401, 1.442695
        %v422 = vpow.pop %v421
        %v423 = vmul.f32 %v402, 1.442695
        %v424 = vpow.pop %v423
        %v425 = vmul.f32 %v403, 1.442695
        %v426 = vpow.pop %v425
        %v427 = vmul.f32 %v404, 1.442695
        %v428 = vpow.pop %v427
        %v429 = vmul.f32 %v405, 1.442695
        %v430 = vpow.pop %v429
        %v431 = vmul.f32 %v406, 1.442695
        %v432 = vpow.pop %v431
        %v433 = vmul.f32 %v407, 1.442695
        %v434 = vpow.pop %v433
        %v435 = vmul.f32 %v408, 1.442695
        %v436 = vpow.pop %v435
        %v437 = vmul.f32 %v409, 1.442695
        %v438 = vpow.pop %v437
        %v439 = vmul.f32 %v410, 1.442695
        %v440 = vpow.pop %v439
        %v441 = vmul.f32 %v411, 1.442695
        %v442 = vpow.pop %v441
        %v443 = vmul.f32 %v412, 1.442695
        %v444 = vpow.pop %v443
        %v445 = vsub.f32 %v414, 1.0
        %v446 = vsub.f32 %v416, 1.0
        %v447 = vsub.f32 %v418, 1.0
        %v448 = vsub.f32 %v420, 1.0
        %v449 = vsub.f32 %v422, 1.0
        %v450 = vsub.f32 %v424, 1.0
        %v451 = vsub.f32 %v426, 1.0
        %v452 = vsub.f32 %v428, 1.0
        %v453 = vsub.f32 %v430, 1.0
        %v454 = vsub.f32 %v432, 1.0
        %v455 = vsub.f32 %v434, 1.0
        %v456 = vsub.f32 %v436, 1.0
        %v457 = vsub.f32 %v438, 1.0
        %v458 = vsub.f32 %v440, 1.0
        %v459 = vsub.f32 %v442, 1.0
        %v460 = vsub.f32 %v444, 1.0
        %v461 = vsel %vm381, %v334, %v445
        %v462 = vsel %vm382, %v337, %v446
        %v463 = vsel %vm383, %v340, %v447
        %v464 = vsel %vm384, %v343, %v448
        %v465 = vsel %vm385, %v346, %v449
        %v466 = vsel %vm386, %v349, %v450
        %v467 = vsel %vm387, %v352, %v451
        %v468 = vsel %vm388, %v355, %v452
        %v469 = vsel %vm389, %v358, %v453
        %v470 = vsel %vm390, %v361, %v454
        %v471 = vsel %vm391, %v364, %v455
        %v472 = vsel %vm392, %v367, %v456
        %v473 = vsel %vm393, %v370, %v457
        %v474 = vsel %vm394, %v373, %v458
        %v475 = vsel %vm395, %v376, %v459
        %v476 = vsel %vm396, %v379, %v460
        %v477 = vld [vmem:[#allocation7] sm:$0xff]
        %v478 = vld [vmem:[#allocation7 + $0x8] sm:$0xff]
        %v479 = vld [vmem:[#allocation7 + $0x10] sm:$0xff]
        %v480 = vld [vmem:[#allocation7 + $0x18] sm:$0xff]
        %v481 = vld [vmem:[#allocation7 + $0x20] sm:$0xff]
        %v482 = vld [vmem:[#allocation7 + $0x28] sm:$0xff]
        %v483 = vld [vmem:[#allocation7 + $0x30] sm:$0xff]
        %v484 = vld [vmem:[#allocation7 + $0x38] sm:$0xff]
        %v485 = vld [vmem:[#allocation7 + $0x40] sm:$0xff]
        %v486 = vld [vmem:[#allocation7 + $0x48] sm:$0xff]
        %v487 = vld [vmem:[#allocation7 + $0x50] sm:$0xff]
        %v488 = vld [vmem:[#allocation7 + $0x58] sm:$0xff]
        %v489 = vld [vmem:[#allocation7 + $0x60] sm:$0xff]
        %v490 = vld [vmem:[#allocation7 + $0x68] sm:$0xff]
        %v491 = vld [vmem:[#allocation7 + $0x70] sm:$0xff]
        %v492 = vld [vmem:[#allocation7 + $0x78] sm:$0xff]
        %v493 = vld [vmem:[%s4] sm:$0x1]
        %v495 = vperm.slane %v493, 0
        %497 = vmatpush.msra.mxu0 %v492
        %498 = vmatpush.msra.mxu0 %v491
        %499 = vmatpush.msra.mxu0 %v490
        %500 = vmatpush.msra.mxu0 %v489
        %501 = vmatpush.msra.mxu0 %v488
        %502 = vmatpush.msra.mxu0 %v487
        %503 = vmatpush.msra.mxu0 %v486
        %504 = vmatpush.msra.mxu0 %v485
        %505 = vmatpush.msra.mxu0 %v484
        %506 = vmatpush.msra.mxu0 %v483
        %507 = vmatpush.msra.mxu0 %v482
        %508 = vmatpush.msra.mxu0 %v481
        %509 = vmatpush.msra.mxu0 %v480
        %510 = vmatpush.msra.mxu0 %v479
        %511 = vmatpush.msra.mxu0 %v478
        %512 = vmatpush.msra.mxu0 %v477
        %513 = vmatmul.f32.gmra.mxu0 %v461
        %v514 = vpop.f32.mrf.mxu0
        %v515 = vadd.f32 %v495, %v514
        %516 = vmatmul.f32.gmra.mxu0 %v462
        %v517 = vpop.f32.mrf.mxu0
        %v518 = vadd.f32 %v495, %v517
        %519 = vmatmul.f32.gmra.mxu0 %v463
        %v520 = vpop.f32.mrf.mxu0
        %v521 = vadd.f32 %v495, %v520
        %522 = vmatmul.f32.gmra.mxu0 %v464
        %v523 = vpop.f32.mrf.mxu0
        %v524 = vadd.f32 %v495, %v523
        %525 = vmatmul.f32.gmra.mxu0 %v465
        %v526 = vpop.f32.mrf.mxu0
        %v527 = vadd.f32 %v495, %v526
        %528 = vmatmul.f32.gmra.mxu0 %v466
        %v529 = vpop.f32.mrf.mxu0
        %v530 = vadd.f32 %v495, %v529
        %531 = vmatmul.f32.gmra.mxu0 %v467
        %v532 = vpop.f32.mrf.mxu0
        %v533 = vadd.f32 %v495, %v532
        %534 = vmatmul.f32.gmra.mxu0 %v468
        %v535 = vpop.f32.mrf.mxu0
        %v536 = vadd.f32 %v495, %v535
        %537 = vmatmul.f32.gmra.mxu0 %v469
        %v538 = vpop.f32.mrf.mxu0
        %v539 = vadd.f32 %v495, %v538
        %540 = vmatmul.f32.gmra.mxu0 %v470
        %v541 = vpop.f32.mrf.mxu0
        %v542 = vadd.f32 %v495, %v541
        %543 = vmatmul.f32.gmra.mxu0 %v471
        %v544 = vpop.f32.mrf.mxu0
        %v545 = vadd.f32 %v495, %v544
        %546 = vmatmul.f32.gmra.mxu0 %v472
        %v547 = vpop.f32.mrf.mxu0
        %v548 = vadd.f32 %v495, %v547
        %549 = vmatmul.f32.gmra.mxu0 %v473
        %v550 = vpop.f32.mrf.mxu0
        %v551 = vadd.f32 %v495, %v550
        %552 = vmatmul.f32.gmra.mxu0 %v474
        %v553 = vpop.f32.mrf.mxu0
        %v554 = vadd.f32 %v495, %v553
        %555 = vmatmul.f32.gmra.mxu0 %v475
        %v556 = vpop.f32.mrf.mxu0
        %v557 = vadd.f32 %v495, %v556
        %558 = vmatmul.f32.gmra.mxu0 %v476
        %v559 = vpop.f32.mrf.mxu0
        %v560 = vadd.f32 %v495, %v559
        %561 = vdwg.mxu0
        %v562 = vmul.f32 %v515, %v515
        %v563 = vmul.f32 %v518, %v518
        %v564 = vmul.f32 %v521, %v521
        %v565 = vmul.f32 %v524, %v524
        %v566 = vmul.f32 %v527, %v527
        %v567 = vmul.f32 %v530, %v530
        %v568 = vmul.f32 %v533, %v533
        %v569 = vmul.f32 %v536, %v536
        %v570 = vmul.f32 %v539, %v539
        %v571 = vmul.f32 %v542, %v542
        %v572 = vmul.f32 %v545, %v545
        %v573 = vmul.f32 %v548, %v548
        %v574 = vmul.f32 %v551, %v551
        %v575 = vmul.f32 %v554, %v554
        %v576 = vmul.f32 %v557, %v557
        %v577 = vmul.f32 %v560, %v560
        %578 = vadd.xlane.f32.xlu0 %v562
        %v579 = vpop.xlane.xlu0 %578
        %580 = vadd.xlane.f32.xlu0 %v563
        %v581 = vpop.xlane.xlu0 %580
        %582 = vadd.xlane.f32.xlu0 %v564
        %v583 = vpop.xlane.xlu0 %582
        %584 = vadd.xlane.f32.xlu0 %v565
        %v585 = vpop.xlane.xlu0 %584
        %586 = vadd.xlane.f32.xlu0 %v566
        %v587 = vpop.xlane.xlu0 %586
        %588 = vadd.xlane.f32.xlu0 %v567
        %v589 = vpop.xlane.xlu0 %588
        %590 = vadd.xlane.f32.xlu0 %v568
        %v591 = vpop.xlane.xlu0 %590
        %592 = vadd.xlane.f32.xlu0 %v569
        %v593 = vpop.xlane.xlu0 %592
        %594 = vadd.xlane.f32.xlu0 %v570
        %v595 = vpop.xlane.xlu0 %594
        %596 = vadd.xlane.f32.xlu0 %v571
        %v597 = vpop.xlane.xlu0 %596
        %598 = vadd.xlane.f32.xlu0 %v572
        %v599 = vpop.xlane.xlu0 %598
        %600 = vadd.xlane.f32.xlu0 %v573
        %v601 = vpop.xlane.xlu0 %600
        %602 = vadd.xlane.f32.xlu0 %v574
        %v603 = vpop.xlane.xlu0 %602
        %604 = vadd.xlane.f32.xlu0 %v575
        %v605 = vpop.xlane.xlu0 %604
        %606 = vadd.xlane.f32.xlu0 %v576
        %v607 = vpop.xlane.xlu0 %606
        %608 = vadd.xlane.f32.xlu0 %v577
        %v609 = vpop.xlane.xlu0 %608
        %v610 = vadd.f32 %v579, 1e-30
        %v611 = vadd.f32 %v581, 1e-30
        %v612 = vadd.f32 %v583, 1e-30
        %v613 = vadd.f32 %v585, 1e-30
        %v614 = vadd.f32 %v587, 1e-30
        %v615 = vadd.f32 %v589, 1e-30
        %v616 = vadd.f32 %v591, 1e-30
        %v617 = vadd.f32 %v593, 1e-30
        %v618 = vadd.f32 %v595, 1e-30
        %v619 = vadd.f32 %v597, 1e-30
        %v620 = vadd.f32 %v599, 1e-30
        %v621 = vadd.f32 %v601, 1e-30
        %v622 = vadd.f32 %v603, 1e-30
        %v623 = vadd.f32 %v605, 1e-30
        %v624 = vadd.f32 %v607, 1e-30
        %v625 = vadd.f32 %v609, 1e-30
        %v626 = vrsqrt.pop %v610
        %v627 = vmul.f32 %v626, %v610
        %v628 = vmul.f32 %v627, %v626
        %v629 = vmul.f32 0.5, %v628
        %v630 = vsub.f32 1.5, %v629
        %v631 = vmul.f32 %v626, %v630
        %vm632 = vweird.f32 %v610
        %vm633 = vweird.f32 %v626
        %vm634 = vmor %vm632, %vm633
        %v635 = vsel %vm634, %v626, %v631
        %v636 = vrsqrt.pop %v611
        %v637 = vmul.f32 %v636, %v611
        %v638 = vmul.f32 %v637, %v636
        %v639 = vmul.f32 0.5, %v638
        %v640 = vsub.f32 1.5, %v639
        %v641 = vmul.f32 %v636, %v640
        %vm642 = vweird.f32 %v611
        %vm643 = vweird.f32 %v636
        %vm644 = vmor %vm642, %vm643
        %v645 = vsel %vm644, %v636, %v641
        %v646 = vrsqrt.pop %v612
        %v647 = vmul.f32 %v646, %v612
        %v648 = vmul.f32 %v647, %v646
        %v649 = vmul.f32 0.5, %v648
        %v650 = vsub.f32 1.5, %v649
        %v651 = vmul.f32 %v646, %v650
        %vm652 = vweird.f32 %v612
        %vm653 = vweird.f32 %v646
        %vm654 = vmor %vm652, %vm653
        %v655 = vsel %vm654, %v646, %v651
        %v656 = vrsqrt.pop %v613
        %v657 = vmul.f32 %v656, %v613
        %v658 = vmul.f32 %v657, %v656
        %v659 = vmul.f32 0.5, %v658
        %v660 = vsub.f32 1.5, %v659
        %v661 = vmul.f32 %v656, %v660
        %vm662 = vweird.f32 %v613
        %vm663 = vweird.f32 %v656
        %vm664 = vmor %vm662, %vm663
        %v665 = vsel %vm664, %v656, %v661
        %v666 = vrsqrt.pop %v614
        %v667 = vmul.f32 %v666, %v614
        %v668 = vmul.f32 %v667, %v666
        %v669 = vmul.f32 0.5, %v668
        %v670 = vsub.f32 1.5, %v669
        %v671 = vmul.f32 %v666, %v670
        %vm672 = vweird.f32 %v614
        %vm673 = vweird.f32 %v666
        %vm674 = vmor %vm672, %vm673
        %v675 = vsel %vm674, %v666, %v671
        %v676 = vrsqrt.pop %v615
        %v677 = vmul.f32 %v676, %v615
        %v678 = vmul.f32 %v677, %v676
        %v679 = vmul.f32 0.5, %v678
        %v680 = vsub.f32 1.5, %v679
        %v681 = vmul.f32 %v676, %v680
        %vm682 = vweird.f32 %v615
        %vm683 = vweird.f32 %v676
        %vm684 = vmor %vm682, %vm683
        %v685 = vsel %vm684, %v676, %v681
        %v686 = vrsqrt.pop %v616
        %v687 = vmul.f32 %v686, %v616
        %v688 = vmul.f32 %v687, %v686
        %v689 = vmul.f32 0.5, %v688
        %v690 = vsub.f32 1.5, %v689
        %v691 = vmul.f32 %v686, %v690
        %vm692 = vweird.f32 %v616
        %vm693 = vweird.f32 %v686
        %vm694 = vmor %vm692, %vm693
        %v695 = vsel %vm694, %v686, %v691
        %v696 = vrsqrt.pop %v617
        %v697 = vmul.f32 %v696, %v617
        %v698 = vmul.f32 %v697, %v696
        %v699 = vmul.f32 0.5, %v698
        %v700 = vsub.f32 1.5, %v699
        %v701 = vmul.f32 %v696, %v700
        %vm702 = vweird.f32 %v617
        %vm703 = vweird.f32 %v696
        %vm704 = vmor %vm702, %vm703
        %v705 = vsel %vm704, %v696, %v701
        %v706 = vrsqrt.pop %v618
        %v707 = vmul.f32 %v706, %v618
        %v708 = vmul.f32 %v707, %v706
        %v709 = vmul.f32 0.5, %v708
        %v710 = vsub.f32 1.5, %v709
        %v711 = vmul.f32 %v706, %v710
        %vm712 = vweird.f32 %v618
        %vm713 = vweird.f32 %v706
        %vm714 = vmor %vm712, %vm713
        %v715 = vsel %vm714, %v706, %v711
        %v716 = vrsqrt.pop %v619
        %v717 = vmul.f32 %v716, %v619
        %v718 = vmul.f32 %v717, %v716
        %v719 = vmul.f32 0.5, %v718
        %v720 = vsub.f32 1.5, %v719
        %v721 = vmul.f32 %v716, %v720
        %vm722 = vweird.f32 %v619
        %vm723 = vweird.f32 %v716
        %vm724 = vmor %vm722, %vm723
        %v725 = vsel %vm724, %v716, %v721
        %v726 = vrsqrt.pop %v620
        %v727 = vmul.f32 %v726, %v620
        %v728 = vmul.f32 %v727, %v726
        %v729 = vmul.f32 0.5, %v728
        %v730 = vsub.f32 1.5, %v729
        %v731 = vmul.f32 %v726, %v730
        %vm732 = vweird.f32 %v620
        %vm733 = vweird.f32 %v726
        %vm734 = vmor %vm732, %vm733
        %v735 = vsel %vm734, %v726, %v731
        %v736 = vrsqrt.pop %v621
        %v737 = vmul.f32 %v736, %v621
        %v738 = vmul.f32 %v737, %v736
        %v739 = vmul.f32 0.5, %v738
        %v740 = vsub.f32 1.5, %v739
        %v741 = vmul.f32 %v736, %v740
        %vm742 = vweird.f32 %v621
        %vm743 = vweird.f32 %v736
        %vm744 = vmor %vm742, %vm743
        %v745 = vsel %vm744, %v736, %v741
        %v746 = vrsqrt.pop %v622
        %v747 = vmul.f32 %v746, %v622
        %v748 = vmul.f32 %v747, %v746
        %v749 = vmul.f32 0.5, %v748
        %v750 = vsub.f32 1.5, %v749
        %v751 = vmul.f32 %v746, %v750
        %vm752 = vweird.f32 %v622
        %vm753 = vweird.f32 %v746
        %vm754 = vmor %vm752, %vm753
        %v755 = vsel %vm754, %v746, %v751
        %v756 = vrsqrt.pop %v623
        %v757 = vmul.f32 %v756, %v623
        %v758 = vmul.f32 %v757, %v756
        %v759 = vmul.f32 0.5, %v758
        %v760 = vsub.f32 1.5, %v759
        %v761 = vmul.f32 %v756, %v760
        %vm762 = vweird.f32 %v623
        %vm763 = vweird.f32 %v756
        %vm764 = vmor %vm762, %vm763
        %v765 = vsel %vm764, %v756, %v761
        %v766 = vrsqrt.pop %v624
        %v767 = vmul.f32 %v766, %v624
        %v768 = vmul.f32 %v767, %v766
        %v769 = vmul.f32 0.5, %v768
        %v770 = vsub.f32 1.5, %v769
        %v771 = vmul.f32 %v766, %v770
        %vm772 = vweird.f32 %v624
        %vm773 = vweird.f32 %v766
        %vm774 = vmor %vm772, %vm773
        %v775 = vsel %vm774, %v766, %v771
        %v776 = vrsqrt.pop %v625
        %v777 = vmul.f32 %v776, %v625
        %v778 = vmul.f32 %v777, %v776
        %v779 = vmul.f32 0.5, %v778
        %v780 = vsub.f32 1.5, %v779
        %v781 = vmul.f32 %v776, %v780
        %vm782 = vweird.f32 %v625
        %vm783 = vweird.f32 %v776
        %vm784 = vmor %vm782, %vm783
        %v785 = vsel %vm784, %v776, %v781
        %v786 = vmul.f32 %v635, 1.118034
        %v787 = vmul.f32 %v645, 1.118034
        %v788 = vmul.f32 %v655, 1.118034
        %v789 = vmul.f32 %v665, 1.118034
        %v790 = vmul.f32 %v675, 1.118034
        %v791 = vmul.f32 %v685, 1.118034
        %v792 = vmul.f32 %v695, 1.118034
        %v793 = vmul.f32 %v705, 1.118034
        %v794 = vmul.f32 %v715, 1.118034
        %v795 = vmul.f32 %v725, 1.118034
        %v796 = vmul.f32 %v735, 1.118034
        %v797 = vmul.f32 %v745, 1.118034
        %v798 = vmul.f32 %v755, 1.118034
        %v799 = vmul.f32 %v765, 1.118034
        %v800 = vmul.f32 %v775, 1.118034
        %v801 = vmul.f32 %v785, 1.118034
        %v802 = vmul.f32 %v515, %v786
        %v803 = vmul.f32 %v518, %v787
        %v804 = vmul.f32 %v521, %v788
        %v805 = vmul.f32 %v524, %v789
        %v806 = vmul.f32 %v527, %v790
        %v807 = vmul.f32 %v530, %v791
        %v808 = vmul.f32 %v533, %v792
        %v809 = vmul.f32 %v536, %v793
        %v810 = vmul.f32 %v539, %v794
        %v811 = vmul.f32 %v542, %v795
        %v812 = vmul.f32 %v545, %v796
        %v813 = vmul.f32 %v548, %v797
        %v814 = vmul.f32 %v551, %v798
        %v815 = vmul.f32 %v554, %v799
        %v816 = vmul.f32 %v557, %v800
        %v817 = vmul.f32 %v560, %v801
        %v818 = vpack.c.bf16 %v802, %v802
        %v819 = vpack.c.bf16 %v803, %v803
        %v820 = vpack.c.bf16 %v804, %v804
        %v821 = vpack.c.bf16 %v805, %v805
        %v822 = vpack.c.bf16 %v806, %v806
        %v823 = vpack.c.bf16 %v807, %v807
        %v824 = vpack.c.bf16 %v808, %v808
        %v825 = vpack.c.bf16 %v809, %v809
        %v826 = vpack.c.bf16 %v810, %v810
        %v827 = vpack.c.bf16 %v811, %v811
        %v828 = vpack.c.bf16 %v812, %v812
        %v829 = vpack.c.bf16 %v813, %v813
        %v830 = vpack.c.bf16 %v814, %v814
        %v831 = vpack.c.bf16 %v815, %v815
        %v832 = vpack.c.bf16 %v816, %v816
        %v833 = vpack.c.bf16 %v817, %v817
        %834 = vst [vmem:[%s277] sm:$0xf] %v818
        %835 = vst [vmem:[%s277 + $0x4] sm:$0xf] %v819
        %836 = vst [vmem:[%s277 + $0x8] sm:$0xf] %v820
        %837 = vst [vmem:[%s277 + $0xc] sm:$0xf] %v821
        %838 = vst [vmem:[%s277 + $0x10] sm:$0xf] %v822
        %839 = vst [vmem:[%s277 + $0x14] sm:$0xf] %v823
        %840 = vst [vmem:[%s277 + $0x18] sm:$0xf] %v824
        %841 = vst [vmem:[%s277 + $0x1c] sm:$0xf] %v825
        %842 = vst [vmem:[%s277 + $0x20] sm:$0xf] %v826
        %843 = vst [vmem:[%s277 + $0x24] sm:$0xf] %v827
        %844 = vst [vmem:[%s277 + $0x28] sm:$0xf] %v828
        %845 = vst [vmem:[%s277 + $0x2c] sm:$0xf] %v829
        %846 = vst [vmem:[%s277 + $0x30] sm:$0xf] %v830
        %847 = vst [vmem:[%s277 + $0x34] sm:$0xf] %v831
        %848 = vst [vmem:[%s277 + $0x38] sm:$0xf] %v832
        %849 = vst [vmem:[%s277 + $0x3c] sm:$0xf] %v833
        %s850 = sand.u32 %s141, 1
        %s851 = scalar_lea.sflag [#allocation4], %s850
        %s852 = sand.u32 %s141, 1
        %s853 = smul.addr %s852, 64
        %s854 = scalar_lea.vmem [#allocation8], %s853
        // Predicated region
        $region53: #{tpu_custom_call.1} parent=39 // pred_check
          %p855 = pneg %p151
        $region54: #{tpu_custom_call.1} parent=39 // pred_check_branch
          %857 = sbr.rel (%p855) target = $region56
        $region55: #{tpu_custom_call.1} parent=39 // pred_region
          %s858 = smul.u32 16, %s23
          %860 = vsyncadd %s851, 0
          %s861 = smul.addr %s858, 4
          %s862 = scalar_lea.hbm %s5, %s861
          %s863 = sshll.u32 %s854, 4
          %s864 = int_to_ptr.vmem [resolvable:$true] %s863
          %s865 = sshll.u32 %s862, 4
          %s866 = int_to_ptr.hbm [resolvable:$true] %s865
          %871 = dma.vmem_to_hbm [thread:$0]  %s864, 1024, %s866, %s851, 64, 64, 4
        $region56: #{tpu_custom_call.1} parent=39 // pred_fallthru
          _
      $region40: #{tpu_custom_call.1} parent=5 // pred_fallthru
        _
      %p872 = scmp.le.s32.totalorder 2, %s18
      // Predicated region
      $region57: #{tpu_custom_call.1} parent=5 // pred_check
        %p873 = pneg %p872
      $region58: #{tpu_custom_call.1} parent=5 // pred_check_branch
        %875 = sbr.rel (%p873) target = $region60
      $region59: #{tpu_custom_call.1} parent=5 // pred_region
        %s876 = ssub.s32 %s18, 2
        // Predicated region
        $region61: #{tpu_custom_call.1} parent=59 // pred_check
          %p877 = pneg %p157
        $region62: #{tpu_custom_call.1} parent=59 // pred_check_branch
          %879 = sbr.rel (%p877) target = $region64
        $region63: #{tpu_custom_call.1} parent=59 // pred_region
          %s880 = sand.u32 %s142, 1
          %s881 = scalar_lea.sflag [#allocation4], %s880
          %s882 = sand.u32 %s142, 1
          %s883 = smul.addr %s882, 64
          %s884 = scalar_lea.vmem [#allocation8], %s883
          %886 = dma.done %s881, 1024
        $region64: #{tpu_custom_call.1} parent=59 // pred_fallthru
          _
      $region60: #{tpu_custom_call.1} parent=5 // pred_fallthru
        _
    $region6: #{tpu_custom_call.1} parent=1 // loop_footer
      %s22 = sadd.s32 1, %s18
    $region7: #{tpu_custom_call.1} parent=1 // loop_footer_branch
      %17 = sbr.rel target = $region3
    $region8: #{tpu_custom_call.1} parent=1 // loop_exit
      _
    %887 = vsyncpa [#allocation3], 1
    %s888 = scalar_lea.sflag [#allocation3], 1
    %889 = vsyncpa %s888, 1
    %890 = vsyncpa [#allocation6], 1
    %891 = vsyncpa [#allocation4], 1
    %s892 = scalar_lea.sflag [#allocation4], 1
    %893 = vsyncpa %s892, 1

</llo_original>
